<compile_context>
chip_gen: v6e
topology: v6e:2x2x1
jax: 0.10.0
libtpu: 0.0.40
codegen_flags: <defaults>
</compile_context>

<pallas_src>
import jax
import jax.numpy as jnp
from jax.experimental import pallas as pl
from jax.experimental.pallas import tpu as pltpu

EPS = 1e-5                 # torch.nn.LayerNorm default eps
_NEG_INF = -1e30           # additive key-padding bias ~= masked_fill(-inf)


# ------------------------------- small helpers --------------------------------

def _round_up(x, m):
    return ((x + m - 1) // m) * m


def _pad_rows(x, n_pad):
    n = x.shape[0]
    if n_pad == n:
        return x
    return jnp.pad(x, ((0, n_pad - n), (0, 0)))


_VMEM_CAP = None


def _vmem_capacity():
    """Per-core VMEM capacity; conservative 64 MiB (v7x) if the query fails."""
    global _VMEM_CAP
    if _VMEM_CAP is None:
        cap = None
        try:
            info = pltpu.get_tpu_info()
            cap = getattr(info, "vmem_capacity_bytes", None)
        except Exception:
            cap = None
        _VMEM_CAP = int(cap) if cap else 64 * 1024 * 1024
    return _VMEM_CAP


def _mosaic_params(est_resident_bytes, semantics=("parallel",)):
    """Generation-aware scoped-VMEM limit: estimate * margin, capped at 85% of
    physical VMEM (never the full capacity; leaves compiler-scratch headroom)."""
    cap = _vmem_capacity()
    ceiling = int(cap * 0.85)
    limit = max(32 * 1024 * 1024, int(est_resident_bytes * 1.5) + (2 << 20))
    limit = min(limit, ceiling)
    return pltpu.CompilerParams(dimension_semantics=tuple(semantics),
                                vmem_limit_bytes=limit)


def _pick_row_block(n, per_row_bytes=0, fixed_bytes=0):
    """Row tile for (N, D) row-parallel kernels, sized to the VMEM budget."""
    cap = _vmem_capacity()
    budget = int(cap * 0.55)
    blk = 512 if cap >= 96 * 1024 * 1024 else 256
    while blk > 64 and fixed_bytes + blk * per_row_bytes > budget:
        blk //= 2
    if n < blk:
        blk = _round_up(max(n, 8), 8)
    return blk, _round_up(n, blk)


def _pick_q_block(t, h):
    """Query tile for attention so the (H, Tq, T) f32 score temporaries fit."""
    budget = int(_vmem_capacity() * 0.30)
    for cand in (256, 128, 64, 32, 16):
        if t % cand == 0 and 2 * h * cand * t * 4 <= budget:
            return cand
    # TODO(synk): non-divisible / very long T falls back to a single full-T block.
    return t


def _pick_f_block(d, f):
    """F (hidden) tile for the FFN reduction axis; resident weights when they fit."""
    budget = int(_vmem_capacity() * 0.35)
    if 2 * d * f * 2 <= budget:                       # w1 + w2 bf16, single-buffered
        return f, 1
    for cand in (4096, 2048, 1024, 512, 256, 128):
        if f % cand == 0 and 2 * d * cand * 2 * 2 <= budget:
            return cand, f // cand
    return f, 1


# ----------------------- feature probes (resolved once) ------------------------

_BUFFERED_OK = None


def _single_buffer_kwargs():
    """Feature-detect BlockSpec(pipeline_mode=pl.Buffered(1)) for grid-invariant
    weight/bias blocks (halves their resident VMEM); graceful fallback."""
    global _BUFFERED_OK
    if _BUFFERED_OK is None:
        def _probe(x_ref, w_ref, o_ref):
            o_ref[...] = x_ref[...] + w_ref[...]

        try:
            z = jnp.zeros((8, 128), jnp.float32)
            out = pl.pallas_call(
                _probe,
                out_shape=jax.ShapeDtypeStruct((8, 128), jnp.float32),
                grid=(1,),
                in_specs=[
                    pl.BlockSpec((8, 128), lambda i: (i, 0)),
                    pl.BlockSpec((8, 128), lambda i: (0, 0),
                                 pipeline_mode=pl.Buffered(1)),
                ],
                out_specs=pl.BlockSpec((8, 128), lambda i: (i, 0)),
            )(z, z)
            jax.block_until_ready(out)
            _BUFFERED_OK = True
        except Exception:
            _BUFFERED_OK = False
    if _BUFFERED_OK:
        return {"pipeline_mode": pl.Buffered(1)}
    return {}


def _const_spec(shape):
    """BlockSpec for a grid-invariant (weight / bias / LN-param) operand."""
    nd = len(shape)
    return pl.BlockSpec(shape, lambda *_: (0,) * nd, **_single_buffer_kwargs())


_ATTN_VARIANT = None


def _resolve_attn_variant():
    """Pick the best-supported big-K head-merge + output-projection strategy."""
    global _ATTN_VARIANT
    if _ATTN_VARIANT is not None:
        return _ATTN_VARIANT

    H, TQ, HD, D = 4, 8, 8, 32   # mirrors the small demo config (hardest alignment case)
    a = ((jnp.arange(H * TQ * HD, dtype=jnp.float32) % 7) - 3.0
         ).reshape(H, TQ, HD).astype(jnp.bfloat16)
    w = ((jnp.arange(H * HD * D, dtype=jnp.float32) % 5) - 2.0
         ).reshape(H, HD, D).astype(jnp.bfloat16)
    ref = jnp.einsum("htd,hde->te", a.astype(jnp.float32), w.astype(jnp.float32))

    # Variant 1: single contraction over (head, head_dim) -> one K=D MXU matmul.
    def k1(a_ref, w_ref, o_ref):
        o_ref[...] = jax.lax.dot_general(
            a_ref[...], w_ref[...], (((0, 2), (0, 1)), ((), ())),
            preferred_element_type=jnp.float32)

    try:
        out = pl.pallas_call(
            k1, out_shape=jax.ShapeDtypeStruct((TQ, D), jnp.float32))(a, w)
        if bool(jnp.allclose(jax.block_until_ready(out), ref, atol=1e-2, rtol=1e-2)):
            _ATTN_VARIANT = 1
            return _ATTN_VARIANT
    except Exception:
        pass

    # Variant 2: merge heads into a VMEM scratch via static lane slices,
    # then one (Tq, D) @ (D, D) matmul.
    def k2(a_ref, w_ref, o_ref, m_ref):
        for h in range(H):
            m_ref[:, h * HD:(h + 1) * HD] = a_ref[h].astype(jnp.float32)
        o_ref[...] = jnp.dot(m_ref[...].astype(jnp.bfloat16), w_ref[...],
                             preferred_element_type=jnp.float32)

    try:
        out = pl.pallas_call(
            k2,
            out_shape=jax.ShapeDtypeStruct((TQ, D), jnp.float32),
            scratch_shapes=[pltpu.VMEM((TQ, H * HD), jnp.float32)],
        )(a, w.reshape(H * HD, D))
        if bool(jnp.allclose(jax.block_until_ready(out), ref, atol=1e-2, rtol=1e-2)):
            _ATTN_VARIANT = 2
            return _ATTN_VARIANT
    except Exception:
        pass

    _ATTN_VARIANT = 3   # batched-over-heads dot_general + sum (always safe)
    return _ATTN_VARIANT


# ------------------------------ in-kernel helpers ------------------------------

def _layernorm(x, g, b):
    mu = jnp.mean(x, axis=-1, keepdims=True)
    var = jnp.mean(jnp.square(x - mu), axis=-1, keepdims=True)
    return (x - mu) * jax.lax.rsqrt(var + EPS) * g + b


def _gelu(x):
    # tanh-approx GELU (EUP tanh instead of a deep VALU erf polynomial).
    # TODO(synk): PyTorch's default GELU is the exact erf form (~1e-3 difference).
    c = 0.7978845608028654  # sqrt(2 / pi)
    return 0.5 * x * (1.0 + jnp.tanh(c * (x + 0.044715 * x * x * x)))


# ---------------------------------- kernels ------------------------------------

def embed_layernorm_kernel(x_ref, m_ref, g_ref, b_ref, o_ref):
    # embedding_layer_norm(tok_emb + pos_emb) * (1 - padding_mask)  (mask fused)
    o_ref[...] = _layernorm(x_ref[...], g_ref[...], b_ref[...]) * m_ref[...]
    # TODO(synk): self.dropout is identity at inference; training-mode dropout omitted.


def linear_kernel(x_ref, w_ref, b_ref, o_ref):
    # bf16 MXU operands, f32 accumulation; output dtype follows out_shape (bf16 for QKV).
    o_ref[...] = (jnp.dot(x_ref[...].astype(jnp.bfloat16), w_ref[...],
                          preferred_element_type=jnp.float32)
                  + b_ref[...]).astype(o_ref.dtype)


def ffn_kernel(y_ref, w1_ref, b1_ref, w2_ref, b2_ref, g_ref, bb_ref, o_ref, acc_ref):
    # final_layer_norm(ResidualMLP(y)) = LN(Linear(GeLU(Linear(y))) + y),
    # K-tiled over F (grid axis 1, "arbitrary") with an f32 accumulator scratch.
    j = pl.program_id(1)
    y = y_ref[...]

    @pl.when(j == 0)
    def _():
        acc_ref[...] = y + b2_ref[...]

    h = _gelu(jnp.dot(y.astype(jnp.bfloat16), w1_ref[...],
                      preferred_element_type=jnp.float32) + b1_ref[...])
    acc_ref[...] += jnp.dot(h.astype(jnp.bfloat16), w2_ref[...],
                            preferred_element_type=jnp.float32)

    @pl.when(j == pl.num_programs(1) - 1)
    def _():
        o_ref[...] = _layernorm(acc_ref[...], g_ref[...], bb_ref[...])


def attn_layer_kernel(q_ref, k_ref, v_ref, bias_ref, x_ref,
                      wo_ref, bo_ref, g_ref, b_ref, o_ref, *scratch):
    """One (batch, query-tile) step over all heads, fused with the output
    projection, residual add and attention LayerNorm (lane-dense (Tq, D) output)."""
    q = q_ref[0]                                     # (H, Tq, hd) bf16; scale folded into Wq
    k = k_ref[0]                                     # (H, T,  hd) bf16
    v = v_ref[0]

    s = jax.lax.dot_general(q, k, (((2,), (2,)), ((0,), (0,))),
                            preferred_element_type=jnp.float32)          # (H, Tq, T)
    s = s + bias_ref[...]                            # (1, 1, T) additive key-padding bias
    m = jnp.max(s, axis=-1, keepdims=True)
    p = jnp.exp(s - m)                               # masked keys underflow to exactly 0
    p = p * pl.reciprocal(jnp.sum(p, axis=-1, keepdims=True), approx=True)
    ctx = jax.lax.dot_general(p.astype(jnp.bfloat16), v,
                              (((2,), (1,)), ((0,), (0,))),
                              preferred_element_type=jnp.float32)        # (H, Tq, hd)
    nh, _, hd = ctx.shape

    if _ATTN_VARIANT == 1:
        # Single big-K (K = H*hd = D) MXU matmul contracting (head, head_dim).
        zo = jax.lax.dot_general(ctx.astype(jnp.bfloat16), wo_ref[...],
                                 (((0, 2), (0, 1)), ((), ())),
                                 preferred_element_type=jnp.float32)     # (Tq, D)
    elif _ATTN_VARIANT == 2:
        # Merge heads in VMEM (static lane slices), then one (Tq, D) @ (D, D) matmul.
        merge_ref = scratch[0]
        for h in range(nh):
            merge_ref[:, h * hd:(h + 1) * hd] = ctx[h]
        zo = jnp.dot(merge_ref[...].astype(jnp.bfloat16), wo_ref[...],
                     preferred_element_type=jnp.float32)                 # (Tq, D)
    else:
        # Safe fallback: batched-over-heads matmuls + tree sum (no serialized chain).
        zo = jnp.sum(
            jax.lax.dot_general(ctx.astype(jnp.bfloat16), wo_ref[...],
                                (((2,), (1,)), ((0,), (0,))),
                                preferred_element_type=jnp.float32),
            axis=0)                                                      # (Tq, D)

    z = x_ref[0] + bo_ref[...] + zo                  # residual + output-proj bias
    o_ref[0] = _layernorm(z, g_ref[...], b_ref[...])


# ----------------------------- pallas_call wrappers ----------------------------

def pallas_embed_layernorm(x, mask_mul, g, b):
    n, d = x.shape
    per_row = d * 4 * 4 + 4 * 2
    fixed = 2 * d * 4 * 2
    blk, n_pad = _pick_row_block(n, per_row, fixed)
    xp = _pad_rows(x, n_pad)
    mp = _pad_rows(mask_mul, n_pad)
    est = fixed + blk * per_row
    out = pl.pallas_call(
        embed_layernorm_kernel,
        out_shape=jax.ShapeDtypeStruct((n_pad, d), jnp.float32),
        grid=(n_pad // blk,),
        in_specs=[pl.BlockSpec((blk, d), lambda i: (i, 0)),
                  pl.BlockSpec((blk, 1), lambda i: (i, 0)),
                  _const_spec((1, d)),
                  _const_spec((1, d))],
        out_specs=pl.BlockSpec((blk, d), lambda i: (i, 0)),
        compiler_params=_mosaic_params(est, ("parallel",)),
    )(xp, mp, g, b)
    return out[:n] if n_pad != n else out


def pallas_linear(x, w, b, out_dtype=jnp.float32):
    n, din = x.shape
    dout = w.shape[1]
    out_bytes = jnp.dtype(out_dtype).itemsize
    per_row = din * 4 * 2 + dout * out_bytes * 2 + dout * 4
    fixed = din * dout * w.dtype.itemsize * 2 + dout * 4 * 2
    blk, n_pad = _pick_row_block(n, per_row, fixed)
    xp = _pad_rows(x, n_pad)
    est = fixed + blk * per_row
    out = pl.pallas_call(
        linear_kernel,
        out_shape=jax.ShapeDtypeStruct((n_pad, dout), out_dtype),
        grid=(n_pad // blk,),
        in_specs=[pl.BlockSpec((blk, din), lambda i: (i, 0)),
                  _const_spec((din, dout)),
                  _const_spec((1, dout))],
        out_specs=pl.BlockSpec((blk, dout), lambda i: (i, 0)),
        compiler_params=_mosaic_params(est, ("parallel",)),
    )(xp, w, b)
    return out[:n] if n_pad != n else out


def pallas_ffn_residual_ln(y, w1, b1, w2, b2, g, bb):
    n, d = y.shape
    f = w1.shape[1]
    fblk, nf = _pick_f_block(d, f)
    wbuf = 1 if nf == 1 else 2
    fixed = 2 * d * fblk * 2 * wbuf + (fblk + 3 * d) * 4 * 2
    per_row = d * 4 * 2 + d * 4 * 2 + d * 4 + fblk * 4
    blk, n_pad = _pick_row_block(n, per_row, fixed)
    yp = _pad_rows(y, n_pad)
    est = fixed + blk * per_row

    if nf == 1:
        w1_spec = _const_spec((d, fblk))
        b1_spec = _const_spec((1, fblk))
        w2_spec = _const_spec((fblk, d))
    else:
        w1_spec = pl.BlockSpec((d, fblk), lambda i, j: (0, j))
        b1_spec = pl.BlockSpec((1, fblk), lambda i, j: (0, j))
        w2_spec = pl.BlockSpec((fblk, d), lambda i, j: (j, 0))

    out = pl.pallas_call(
        ffn_kernel,
        out_shape=jax.ShapeDtypeStruct((n_pad, d), jnp.float32),
        grid=(n_pad // blk, nf),
        in_specs=[pl.BlockSpec((blk, d), lambda i, j: (i, 0)),
                  w1_spec, b1_spec, w2_spec,
                  _const_spec((1, d)),
                  _const_spec((1, d)),
                  _const_spec((1, d))],
        out_specs=pl.BlockSpec((blk, d), lambda i, j: (i, 0)),
        scratch_shapes=[pltpu.VMEM((blk, d), jnp.float32)],
        compiler_params=_mosaic_params(est, ("parallel", "arbitrary")),
    )(yp, w1, b1, w2, b2, g, bb)
    return out[:n] if n_pad != n else out


def pallas_attention_block(q, k, v, bias, x_btd, p):
    B, H, T, hd = q.shape
    D = H * hd
    variant = _resolve_attn_variant()
    tq = _pick_q_block(T, H)
    nq = T // tq
    wo = p["wo_2d"] if variant == 2 else p["wo_h"]

    est = (tq * D * 2 * 2                    # q block (double-buffered)
           + 2 * T * D * 2 * 2               # k, v blocks
           + T * 4 * 2                       # key-padding bias
           + tq * D * 4 * 2                  # residual x block
           + tq * D * 4 * 2                  # output block
           + wo.size * 2 * 2                 # output-projection weight
           + 2 * H * tq * T * 4              # score + softmax temporaries
           + tq * D * 4                      # ctx
           + (H * tq * D * 4 if variant == 3 else tq * D * 4)
           + 4 * D * 4)

    scratch_shapes = []
    if variant == 2:
        scratch_shapes = [pltpu.VMEM((tq, D), jnp.float32)]

    return pl.pallas_call(
        attn_layer_kernel,
        out_shape=jax.ShapeDtypeStruct((B, T, D), jnp.float32),
        grid=(B, nq),
        in_specs=[
            pl.BlockSpec((1, H, tq, hd), lambda b, i: (b, 0, i, 0)),
            pl.BlockSpec((1, H, T, hd), lambda b, i: (b, 0, 0, 0)),
            pl.BlockSpec((1, H, T, hd), lambda b, i: (b, 0, 0, 0)),
            pl.BlockSpec((1, 1, T), lambda b, i: (b, 0, 0)),
            pl.BlockSpec((1, tq, D), lambda b, i: (b, i, 0)),
            _const_spec(wo.shape),
            _const_spec((1, D)),
            _const_spec((1, D)),
            _const_spec((1, D)),
        ],
        out_specs=pl.BlockSpec((1, tq, D), lambda b, i: (b, i, 0)),
        scratch_shapes=scratch_shapes,
        compiler_params=_mosaic_params(est, ("parallel", "parallel")),
    )(q, k, v, bias, x_btd, wo, p["bo"], p["ln1g"], p["ln1b"])


# ------------------------------ model forward (glue) ---------------------------

def transformer_layer_forward(x_btd, mask_bias, p, num_heads):
    """One pytext TransformerLayer: MHSA + post-LN + ResidualMLP + post-LN."""
    B, T, D = x_btd.shape
    H = num_heads
    hd = D // H
    x2 = x_btd.reshape(B * T, D)

    # Fused Q/K/V projection emitted directly in bf16 (no f32 write + cast pass).
    qkv = pallas_linear(x2, p["w_qkv"], p["b_qkv"], out_dtype=jnp.bfloat16)
    qkv = qkv.reshape(B, T, 3, H, hd)
    q = jnp.transpose(qkv[:, :, 0], (0, 2, 1, 3))                     # (B, H, T, hd) bf16
    k = jnp.transpose(qkv[:, :, 1], (0, 2, 1, 3))
    v = jnp.transpose(qkv[:, :, 2], (0, 2, 1, 3))
    # TODO(synk): the three head-layout transposes are bf16 XLA copies; folding the
    # head split into the projection kernel needs unaligned lane slicing in Mosaic.

    # Attention + output projection + residual + attention LayerNorm, query-tiled.
    y_btd = pallas_attention_block(q, k, v, mask_bias, x_btd, p)
    # TODO(synk): layer-level nn.Dropout on the attention output is identity at inference.

    out2 = pallas_ffn_residual_ln(y_btd.reshape(B * T, D),
                                  p["w1"], p["b1"], p["w2"], p["b2"],
                                  p["ln2g"], p["ln2b"])
    return out2.reshape(B, T, D)


def accelerator_transformer_forward(tokens, prepared, padding_idx, num_heads,
                                    time_major_states=True):
    """Matches AcceleratorTransformer.forward: returns list of (T, B, D) states."""
    B, T = tokens.shape
    D = prepared["tok_emb"].shape[1]

    padding_mask = tokens == padding_idx                              # (B, T) bool

    embedded = prepared["tok_emb"][tokens]                            # (B, T, D)
    nonpad = (~padding_mask).astype(jnp.int32)
    positions = jnp.cumsum(nonpad, axis=1) * nonpad + padding_idx     # fairseq-style
    embedded_positions = prepared["pos_emb"][positions]               # (B, T, D)

    e2d = (embedded + embedded_positions).reshape(B * T, D)
    mask_mul = nonpad.astype(jnp.float32).reshape(B * T, 1)
    # LN + pad-mask zeroing fused in one kernel (no external full-tensor where pass).
    padded = pallas_embed_layernorm(e2d, mask_mul,
                                    prepared["emb_ln_g"], prepared["emb_ln_b"])
    x_btd = padded.reshape(B, T, D)

    # Additive key-padding bias: exp(score - 1e30 - max) underflows to exactly 0,
    # matching masked_fill(-inf) + softmax (fully-padded rows become uniform, not NaN).
    mask_bias = jnp.where(padding_mask, _NEG_INF, 0.0).astype(jnp.float32)[:, None, :]

    xs = [x_btd]
    for layer_params in prepared["layers"]:
        x_btd = transformer_layer_forward(x_btd, mask_bias, layer_params, num_heads)
        xs.append(x_btd)

    if time_major_states:
        # (T, B, D) per the module's transpose(0, 1); pure layout traffic for the
        # return format — callers that stay batch-major can pass time_major_states=False.
        return [jnp.transpose(s, (1, 0, 2)) for s in xs]
    return xs


# ------------------------------ parameter handling ------------------------------

def init_params(key, vocab_size, num_pos, D, F, num_layers, pad_idx):
    """Raw (f32, torch-like) module parameters."""
    scale = 0.02
    keys = jax.random.split(key, 2 + num_layers)
    tok_emb = jax.random.normal(keys[0], (vocab_size, D), jnp.float32) * scale
    tok_emb = tok_emb.at[pad_idx].set(0.0)              # nn.Embedding padding_idx row
    pos_emb = jax.random.normal(keys[1], (num_pos, D), jnp.float32) * scale
    pos_emb = pos_emb.at[pad_idx].set(0.0)

    layers = []
    for l in range(num_layers):
        lk = jax.random.split(keys[2 + l], 8)

        def lin(k, i, o):
            return jax.random.normal(k, (i, o), jnp.float32) * scale

        layers.append(dict(
            wq=lin(lk[0], D, D), bq=jnp.zeros((1, D), jnp.float32),
            wk=lin(lk[1], D, D), bk=jnp.zeros((1, D), jnp.float32),
            wv=lin(lk[2], D, D), bv=jnp.zeros((1, D), jnp.float32),
            wo=lin(lk[3], D, D), bo=jnp.zeros((1, D), jnp.float32),
            ln1g=jnp.ones((1, D), jnp.float32), ln1b=jnp.zeros((1, D), jnp.float32),
            w1=lin(lk[4], D, F), b1=jax.random.normal(lk[5], (1, F), jnp.float32) * scale,
            w2=lin(lk[6], F, D), b2=jax.random.normal(lk[7], (1, D), jnp.float32) * scale,
            ln2g=jnp.ones((1, D), jnp.float32), ln2b=jnp.zeros((1, D), jnp.float32),
        ))

    return dict(tok_emb=tok_emb, pos_emb=pos_emb,
                emb_ln_g=jnp.ones((1, D), jnp.float32),
                emb_ln_b=jnp.zeros((1, D), jnp.float32),
                layers=layers)


def prepare_params(params, num_heads):
    """Inference-time parameter transform: fuse QKV (attention scaling folded into
    Wq/bq), keep Wo in both per-head and 2-D forms, cast MXU weights to bf16."""
    D = params["tok_emb"].shape[1]
    assert D % num_heads == 0
    hd = D // num_heads
    scaling = hd ** -0.5

    layers = []
    for p in params["layers"]:
        w_qkv = jnp.concatenate([p["wq"] * scaling, p["wk"], p["wv"]], axis=1)
        b_qkv = jnp.concatenate([p["bq"] * scaling, p["bk"], p["bv"]], axis=1)
        wo_bf16 = p["wo"].astype(jnp.bfloat16)
        layers.append(dict(
            w_qkv=w_qkv.astype(jnp.bfloat16), b_qkv=b_qkv,
            wo_h=wo_bf16.reshape(num_heads, hd, D), wo_2d=wo_bf16, bo=p["bo"],
            ln1g=p["ln1g"], ln1b=p["ln1b"],
            w1=p["w1"].astype(jnp.bfloat16), b1=p["b1"],
            w2=p["w2"].astype(jnp.bfloat16), b2=p["b2"],
            ln2g=p["ln2g"], ln2b=p["ln2b"],
        ))
    return dict(tok_emb=params["tok_emb"], pos_emb=params["pos_emb"],
                emb_ln_g=params["emb_ln_g"], emb_ln_b=params["emb_ln_b"],
                layers=layers)


# ------------------------------------ main --------------------------------------

if __name__ == "__main__":
    B, T, D, H, F = 2, 8, 32, 4, 128
    VOCAB = 50
    PAD = 1
    NUM_LAYERS = 2
    NUM_POS = T + PAD + 1

    key = jax.random.PRNGKey(0)
    k_tok, k_par = jax.random.split(key)

    tokens = jax.random.randint(k_tok, (B, T), 2, VOCAB, dtype=jnp.int32)
    tokens = tokens.at[0, -3:].set(PAD)   # pad tail of sequence 0
    tokens = tokens.at[1, -1:].set(PAD)   # pad tail of sequence 1

    raw_params = init_params(k_par, VOCAB, NUM_POS, D, F, NUM_LAYERS, PAD)
    params = prepare_params(raw_params, H)

    # Resolve feature probes eagerly before building the forward pass.
    _single_buffer_kwargs()
    _resolve_attn_variant()

    states = accelerator_transformer_forward(tokens, params, PAD, H)
    states = jax.block_until_ready(states)

    assert len(states) == NUM_LAYERS + 1
    for s in states:
        assert s.shape == (T, B, D)
        assert bool(jnp.all(jnp.isfinite(s)))

    print("KERNEL_OK")
</pallas_src>

<mosaic_0001>
module attributes {stable_mosaic.version = 11 : i64} {
  func.func @_probe(%arg0: i32, %arg1: memref<8x128xf32, #tpu.memory_space<vmem>>, %arg2: memref<8x128xf32, #tpu.memory_space<vmem>>, %arg3: memref<8x128xf32, #tpu.memory_space<vmem>>) attributes {dimension_semantics = [#tpu.dimension_semantics<arbitrary>], iteration_bounds = array<i64: 1>, scalar_prefetch = 0 : i64, scratch_operands = 0 : i64, tpu.core_type = #tpu.core_type<tc>, window_params = [{transform_indices = @transform_0, window_bounds = array<i64: 8, 128>}, {pipeline_mode = #tpu.pipeline_mode<synchronous>, transform_indices = @transform_1, window_bounds = array<i64: 8, 128>}, {transform_indices = @transform_2, window_bounds = array<i64: 8, 128>}]} {
    %c0 = arith.constant 0 : index
    %c0_0 = arith.constant 0 : index
    %0 = vector.load %arg1[%c0, %c0_0] : memref<8x128xf32, #tpu.memory_space<vmem>>, vector<8x128xf32>
    %c0_1 = arith.constant 0 : index
    %c0_2 = arith.constant 0 : index
    %1 = vector.load %arg2[%c0_1, %c0_2] : memref<8x128xf32, #tpu.memory_space<vmem>>, vector<8x128xf32>
    %2 = arith.addf %0, %1 : vector<8x128xf32>
    %c0_3 = arith.constant 0 : index
    %c0_4 = arith.constant 0 : index
    %3 = vector.load %arg3[%c0_3, %c0_4] : memref<8x128xf32, #tpu.memory_space<vmem>>, vector<8x128xf32>
    tpu.vector_store %arg3[%c0_3, %c0_4], %2 {strides = array<i32>} : memref<8x128xf32, #tpu.memory_space<vmem>>, vector<8x128xf32>,
    return
  }
  func.func @transform_0(%arg0: i32) -> (i32, i32) {
    %c0_i32 = arith.constant 0 : i32
    %c0_i32_0 = arith.constant 0 : i32
    return %arg0, %c0_i32 : i32, i32
  }
  func.func @transform_1(%arg0: i32) -> (i32, i32) {
    %c0_i32 = arith.constant 0 : i32
    %c0_i32_0 = arith.constant 0 : i32
    %c0_i32_1 = arith.constant 0 : i32
    return %c0_i32, %c0_i32_0 : i32, i32
  }
  func.func @transform_2(%arg0: i32) -> (i32, i32) {
    %c0_i32 = arith.constant 0 : i32
    %c0_i32_0 = arith.constant 0 : i32
    return %arg0, %c0_i32 : i32, i32
  }
}

module attributes {stable_mosaic.version = 11 : i64} {
  func.func @k2(%arg0: memref<4x8x8xbf16, #tpu.memory_space<vmem>>, %arg1: memref<32x32xbf16, #tpu.memory_space<vmem>>, %arg2: memref<8x32xf32, #tpu.memory_space<vmem>>, %arg3: memref<8x32xf32, #tpu.memory_space<vmem>>) attributes {dimension_semantics = [], scalar_prefetch = 0 : i64, scratch_operands = 1 : i64, tpu.core_type = #tpu.core_type<tc>} {
    %c0 = arith.constant 0 : index
    %c0_0 = arith.constant 0 : index
    %c0_1 = arith.constant 0 : index
    %0 = vector.load %arg0[%c0, %c0_0, %c0_1] : memref<4x8x8xbf16, #tpu.memory_space<vmem>>, vector<1x8x8xbf16>
    %1 = vector.shape_cast %0 : vector<1x8x8xbf16> to vector<8x8xbf16>
    %2 = arith.extf %1 : vector<8x8xbf16> to vector<8x8xf32>
    %c0_2 = arith.constant 0 : index
    %c0_3 = arith.constant 0 : index
    %3 = vector.load %arg3[%c0_2, %c0_3] : memref<8x32xf32, #tpu.memory_space<vmem>>, vector<8x8xf32>
    tpu.vector_store %arg3[%c0_2, %c0_3], %2 {strides = array<i32>} : memref<8x32xf32, #tpu.memory_space<vmem>>, vector<8x8xf32>,
    %c1 = arith.constant 1 : index
    %c0_4 = arith.constant 0 : index
    %c0_5 = arith.constant 0 : index
    %4 = vector.load %arg0[%c1, %c0_4, %c0_5] : memref<4x8x8xbf16, #tpu.memory_space<vmem>>, vector<1x8x8xbf16>
    %5 = vector.shape_cast %4 : vector<1x8x8xbf16> to vector<8x8xbf16>
    %6 = arith.extf %5 : vector<8x8xbf16> to vector<8x8xf32>
    %c0_6 = arith.constant 0 : index
    %c8 = arith.constant 8 : index
    %7 = vector.load %arg3[%c0_6, %c8] : memref<8x32xf32, #tpu.memory_space<vmem>>, vector<8x8xf32>
    tpu.vector_store %arg3[%c0_6, %c8], %6 {strides = array<i32>} : memref<8x32xf32, #tpu.memory_space<vmem>>, vector<8x8xf32>,
    %c2 = arith.constant 2 : index
    %c0_7 = arith.constant 0 : index
    %c0_8 = arith.constant 0 : index
    %8 = vector.load %arg0[%c2, %c0_7, %c0_8] : memref<4x8x8xbf16, #tpu.memory_space<vmem>>, vector<1x8x8xbf16>
    %9 = vector.shape_cast %8 : vector<1x8x8xbf16> to vector<8x8xbf16>
    %10 = arith.extf %9 : vector<8x8xbf16> to vector<8x8xf32>
    %c0_9 = arith.constant 0 : index
    %c16 = arith.constant 16 : index
    %11 = vector.load %arg3[%c0_9, %c16] : memref<8x32xf32, #tpu.memory_space<vmem>>, vector<8x8xf32>
    tpu.vector_store %arg3[%c0_9, %c16], %10 {strides = array<i32>} : memref<8x32xf32, #tpu.memory_space<vmem>>, vector<8x8xf32>,
    %c3 = arith.constant 3 : index
    %c0_10 = arith.constant 0 : index
    %c0_11 = arith.constant 0 : index
    %12 = vector.load %arg0[%c3, %c0_10, %c0_11] : memref<4x8x8xbf16, #tpu.memory_space<vmem>>, vector<1x8x8xbf16>
    %13 = vector.shape_cast %12 : vector<1x8x8xbf16> to vector<8x8xbf16>
    %14 = arith.extf %13 : vector<8x8xbf16> to vector<8x8xf32>
    %c0_12 = arith.constant 0 : index
    %c24 = arith.constant 24 : index
    %15 = vector.load %arg3[%c0_12, %c24] : memref<8x32xf32, #tpu.memory_space<vmem>>, vector<8x8xf32>
    tpu.vector_store %arg3[%c0_12, %c24], %14 {strides = array<i32>} : memref<8x32xf32, #tpu.memory_space<vmem>>, vector<8x8xf32>,
    %c0_13 = arith.constant 0 : index
    %c0_14 = arith.constant 0 : index
    %16 = vector.load %arg3[%c0_13, %c0_14] : memref<8x32xf32, #tpu.memory_space<vmem>>, vector<8x32xf32>
    %17 = arith.truncf %16 : vector<8x32xf32> to vector<8x32xbf16>
    %c0_15 = arith.constant 0 : index
    %c0_16 = arith.constant 0 : index
    %18 = vector.load %arg1[%c0_15, %c0_16] : memref<32x32xbf16, #tpu.memory_space<vmem>>, vector<32x32xbf16>
    %cst = arith.constant dense<0.000000e+00> : vector<8x32xf32>
    %19 = tpu.matmul %17, %18, %cst {dimension_numbers = #tpu.dot_dimension_numbers<[1], [0], [0], [1], [0, 0, 1, 1], [], []>} : vector<8x32xbf16>, vector<32x32xbf16>, vector<8x32xf32> -> vector<8x32xf32>
    %c0_17 = arith.constant 0 : index
    %c0_18 = arith.constant 0 : index
    %20 = vector.load %arg2[%c0_17, %c0_18] : memref<8x32xf32, #tpu.memory_space<vmem>>, vector<8x32xf32>
    tpu.vector_store %arg2[%c0_17, %c0_18], %19 {strides = array<i32>} : memref<8x32xf32, #tpu.memory_space<vmem>>, vector<8x32xf32>,
    return
  }
}

module attributes {stable_mosaic.version = 11 : i64} {
  func.func @embed_layernorm_kernel(%arg0: i32, %arg1: memref<16x32xf32, #tpu.memory_space<vmem>>, %arg2: memref<16x1xf32, #tpu.memory_space<vmem>>, %arg3: memref<1x32xf32, #tpu.memory_space<vmem>>, %arg4: memref<1x32xf32, #tpu.memory_space<vmem>>, %arg5: memref<16x32xf32, #tpu.memory_space<vmem>>) attributes {dimension_semantics = [#tpu.dimension_semantics<parallel>], iteration_bounds = array<i64: 1>, scalar_prefetch = 0 : i64, scratch_operands = 0 : i64, tpu.core_type = #tpu.core_type<tc>, window_params = [{transform_indices = @transform_0, window_bounds = array<i64: 16, 32>}, {transform_indices = @transform_1, window_bounds = array<i64: 16, 1>}, {pipeline_mode = #tpu.pipeline_mode<synchronous>, transform_indices = @transform_2, window_bounds = array<i64: 1, 32>}, {pipeline_mode = #tpu.pipeline_mode<synchronous>, transform_indices = @transform_3, window_bounds = array<i64: 1, 32>}, {transform_indices = @transform_4, window_bounds = array<i64: 16, 32>}]} {
    %c0 = arith.constant 0 : index
    %c0_0 = arith.constant 0 : index
    %0 = vector.load %arg1[%c0, %c0_0] : memref<16x32xf32, #tpu.memory_space<vmem>>, vector<16x32xf32>
    %c0_1 = arith.constant 0 : index
    %c0_2 = arith.constant 0 : index
    %1 = vector.load %arg3[%c0_1, %c0_2] : memref<1x32xf32, #tpu.memory_space<vmem>>, vector<1x32xf32>
    %c0_3 = arith.constant 0 : index
    %c0_4 = arith.constant 0 : index
    %2 = vector.load %arg4[%c0_3, %c0_4] : memref<1x32xf32, #tpu.memory_space<vmem>>, vector<1x32xf32>
    %cst = arith.constant dense<0.000000e+00> : vector<16xf32>
    %3 = vector.multi_reduction <add>, %0, %cst [1] : vector<16x32xf32> to vector<16xf32>
    %4 = vector.shape_cast %3 : vector<16xf32> to vector<16x1xf32>
    %cst_5 = arith.constant 3.200000e+01 : f32
    %5 = vector.broadcast %cst_5 : f32 to vector<16x1xf32>
    %6 = arith.divf %4, %5 : vector<16x1xf32>
    %7 = vector.broadcast %6 : vector<16x1xf32> to vector<16x32xf32>
    %8 = arith.subf %0, %7 : vector<16x32xf32>
    %9 = arith.mulf %8, %8 : vector<16x32xf32>
    %cst_6 = arith.constant dense<0.000000e+00> : vector<16xf32>
    %10 = vector.multi_reduction <add>, %9, %cst_6 [1] : vector<16x32xf32> to vector<16xf32>
    %11 = vector.shape_cast %10 : vector<16xf32> to vector<16x1xf32>
    %cst_7 = arith.constant 3.200000e+01 : f32
    %12 = vector.broadcast %cst_7 : f32 to vector<16x1xf32>
    %13 = arith.divf %11, %12 : vector<16x1xf32>
    %14 = vector.broadcast %6 : vector<16x1xf32> to vector<16x32xf32>
    %15 = arith.subf %0, %14 : vector<16x32xf32>
    %cst_8 = arith.constant 9.99999974E-6 : f32
    %16 = vector.broadcast %cst_8 : f32 to vector<16x1xf32>
    %17 = arith.addf %13, %16 : vector<16x1xf32>
    %18 = math.rsqrt %17 : vector<16x1xf32>
    %19 = vector.broadcast %18 : vector<16x1xf32> to vector<16x32xf32>
    %20 = arith.mulf %15, %19 : vector<16x32xf32>
    %21 = vector.broadcast %1 : vector<1x32xf32> to vector<16x32xf32>
    %22 = arith.mulf %20, %21 : vector<16x32xf32>
    %23 = vector.broadcast %2 : vector<1x32xf32> to vector<16x32xf32>
    %24 = arith.addf %22, %23 : vector<16x32xf32>
    %c0_9 = arith.constant 0 : index
    %c0_10 = arith.constant 0 : index
    %25 = vector.load %arg2[%c0_9, %c0_10] : memref<16x1xf32, #tpu.memory_space<vmem>>, vector<16x1xf32>
    %26 = vector.broadcast %25 : vector<16x1xf32> to vector<16x32xf32>
    %27 = arith.mulf %24, %26 : vector<16x32xf32>
    %c0_11 = arith.constant 0 : index
    %c0_12 = arith.constant 0 : index
    %28 = vector.load %arg5[%c0_11, %c0_12] : memref<16x32xf32, #tpu.memory_space<vmem>>, vector<16x32xf32>
    tpu.vector_store %arg5[%c0_11, %c0_12], %27 {strides = array<i32>} : memref<16x32xf32, #tpu.memory_space<vmem>>, vector<16x32xf32>,
    return
  }
  func.func @transform_0(%arg0: i32) -> (i32, i32) {
    %c0_i32 = arith.constant 0 : i32
    %c0_i32_0 = arith.constant 0 : i32
    return %arg0, %c0_i32 : i32, i32
  }
  func.func @transform_1(%arg0: i32) -> (i32, i32) {
    %c0_i32 = arith.constant 0 : i32
    %c0_i32_0 = arith.constant 0 : i32
    return %arg0, %c0_i32 : i32, i32
  }
  func.func @transform_2(%arg0: i32) -> (i32, i32) {
    %c0_i32 = arith.constant 0 : i32
    %c0_i32_0 = arith.constant 0 : i32
    %c0_i32_1 = arith.constant 0 : i32
    return %c0_i32, %c0_i32_0 : i32, i32
  }
  func.func @transform_3(%arg0: i32) -> (i32, i32) {
    %c0_i32 = arith.constant 0 : i32
    %c0_i32_0 = arith.constant 0 : i32
    %c0_i32_1 = arith.constant 0 : i32
    return %c0_i32, %c0_i32_0 : i32, i32
  }
  func.func @transform_4(%arg0: i32) -> (i32, i32) {
    %c0_i32 = arith.constant 0 : i32
    %c0_i32_0 = arith.constant 0 : i32
    return %arg0, %c0_i32 : i32, i32
  }
}

</mosaic_0001>

<llo_original>
// kernel: tpu_custom_call.1
$region0: #{tpu_custom_call.1}
  #allocation0 [shape = 'u32[]', space=smem, size = 0x4, offset = 0x4, fixed_abs, tag = 'smem constant byte address 0x4 - core index']
  #allocation1 [shape = 'u32[144,128]{1,0:T(1,128)}', space=vmem, size = 0x12000, scoped, tag = 'internal scratch']
  %s0 = inlined_call_operand.hbm [shape: f32[8,128], index: 0, kind: input, shape index: {}]
  %s1 = inlined_call_operand.hbm [shape: f32[8,128], index: 1, kind: input, shape index: {}]
  %s2 = inlined_call_operand.hbm [shape: f32[8,128], index: 2, kind: output, shape index: {}]
  %s3 = sld [smem:[#allocation0]]
  $region26: #{tpu_custom_call.1} parent=0
    _
  %s5 = ssub.s32 1, %s3
  %s6 = scalar_select 0, %s5, %s3
  $region1: #{tpu_custom_call.1} parent=0
    #allocation2 [shape = 'u8[4096]{0}', space=vmem, size = 0x1000, scoped, tag = 'input window, operand 0, single buffered']
    #allocation3 [shape = 's32[1]{0}', space=sflag, size = 0x4, scoped, tag = 'scoped memory for tpu_custom_call.1']
    #allocation4 [shape = 's32[1]{0}', space=sflag, size = 0x4, scoped, tag = 'scoped memory for tpu_custom_call.1']
    #allocation5 [shape = 'u8[4096]{0}', space=vmem, size = 0x1000, scoped, tag = 'input window, operand 1, single buffered']
    #allocation6 [shape = 's32[1]{0}', space=sflag, size = 0x4, scoped, tag = 'scoped memory for tpu_custom_call.1']
    #allocation7 [shape = 'u8[4096]{0}', space=vmem, size = 0x1000, scoped, tag = 'output window, operand 0, single buffered']
    %7 = vsyncpa [#allocation3], 0
    %8 = vsyncpa [#allocation6], 0
    %9 = vsyncpa [#allocation4], 0
    // Predicated region
    $region2: #{tpu_custom_call.1} parent=1 // pred_check
      _
    $region3: #{tpu_custom_call.1} parent=1 // pred_check_branch
      %11 = sbr.rel (0) target = $region5
    $region4: #{tpu_custom_call.1} parent=1 // pred_region
      %s13 = ssub.s32 128, 128
      %14 = vsyncadd [#allocation3], %s13
      %s16 = sshll.u32 [#allocation2], 4
      %s17 = int_to_ptr.vmem [resolvable:$true] %s16
      %19 = dma.hbm_to_vmem [thread:$0]  %s0, 128, %s17, [#allocation3]
    $region5: #{tpu_custom_call.1} parent=1 // pred_fallthru
      _
    // Predicated region
    $region6: #{tpu_custom_call.1} parent=1 // pred_check
      _
    $region7: #{tpu_custom_call.1} parent=1 // pred_check_branch
      %21 = sbr.rel (0) target = $region9
    $region8: #{tpu_custom_call.1} parent=1 // pred_region
      %s23 = ssub.s32 128, 128
      %24 = vsyncadd [#allocation6], %s23
      %s26 = sshll.u32 [#allocation5], 4
      %s27 = int_to_ptr.vmem [resolvable:$true] %s26
      %29 = dma.hbm_to_vmem [thread:$0]  %s1, 128, %s27, [#allocation6]
    $region9: #{tpu_custom_call.1} parent=1 // pred_fallthru
      _
    // Predicated region
    $region10: #{tpu_custom_call.1} parent=1 // pred_check
      _
    $region11: #{tpu_custom_call.1} parent=1 // pred_check_branch
      %31 = sbr.rel (0) target = $region13
    $region12: #{tpu_custom_call.1} parent=1 // pred_region
      %32 = dma.done [#allocation3], 128
    $region13: #{tpu_custom_call.1} parent=1 // pred_fallthru
      _
    // Predicated region
    $region14: #{tpu_custom_call.1} parent=1 // pred_check
      _
    $region15: #{tpu_custom_call.1} parent=1 // pred_check_branch
      %34 = sbr.rel (0) target = $region17
    $region16: #{tpu_custom_call.1} parent=1 // pred_region
      %35 = dma.done [#allocation6], 128
    $region17: #{tpu_custom_call.1} parent=1 // pred_fallthru
      _
    %v36 = vld [vmem:[#allocation2] sm:$0xff]
    %v37 = vld [vmem:[#allocation5] sm:$0xff]
    %v38 = vadd.f32 %v36, %v37
    %39 = vst [vmem:[#allocation7] sm:$0xff] %v38
    // Predicated region
    $region18: #{tpu_custom_call.1} parent=1 // pred_check
      _
    $region19: #{tpu_custom_call.1} parent=1 // pred_check_branch
      %41 = sbr.rel (0) target = $region21
    $region20: #{tpu_custom_call.1} parent=1 // pred_region
      %s43 = ssub.s32 128, 128
      %44 = vsyncadd [#allocation4], %s43
      %s46 = sshll.u32 [#allocation7], 4
      %s47 = int_to_ptr.vmem [resolvable:$true] %s46
      %49 = dma.vmem_to_hbm [thread:$0]  %s47, 128, %s2, [#allocation4]
    $region21: #{tpu_custom_call.1} parent=1 // pred_fallthru
      _
    // Predicated region
    $region22: #{tpu_custom_call.1} parent=1 // pred_check
      _
    $region23: #{tpu_custom_call.1} parent=1 // pred_check_branch
      %51 = sbr.rel (0) target = $region25
    $region24: #{tpu_custom_call.1} parent=1 // pred_region
      %52 = dma.done [#allocation4], 128
    $region25: #{tpu_custom_call.1} parent=1 // pred_fallthru
      _
    %53 = vsyncpa [#allocation3], 1
    %54 = vsyncpa [#allocation6], 1
    %55 = vsyncpa [#allocation4], 1

// kernel: tpu_custom_call.1
$region0: #{tpu_custom_call.1}
  #allocation0 [shape = 'u32[]', space=smem, size = 0x4, offset = 0x4, fixed_abs, tag = 'smem constant byte address 0x4 - core index']
  #allocation1 [shape = 'u32[144,128]{1,0:T(1,128)}', space=vmem, size = 0x12000, scoped, tag = 'internal scratch']
  #allocation2 [shape = 'f32[8,32]{1,0:T(8,128)}', space=vmem, size = 0x1000, scoped, tag = 'scratch operand']
  %s0 = inlined_call_operand.hbm [shape: bf16[4,8,8], index: 0, kind: input, shape index: {}]
  %s1 = inlined_call_operand.hbm [shape: bf16[32,32], index: 1, kind: input, shape index: {}]
  %s2 = inlined_call_operand.hbm [shape: f32[8,32], index: 2, kind: output, shape index: {}]
  %s3 = sld [smem:[#allocation0]]
  $region26: #{tpu_custom_call.1} parent=0
    _
  %s5 = ssub.s32 1, %s3
  %s6 = scalar_select 0, %s5, %s3
  $region1: #{tpu_custom_call.1} parent=0
    #allocation3 [shape = 'u8[8192]{0}', space=vmem, size = 0x2000, scoped, tag = 'input window, operand 0, single buffered']
    #allocation4 [shape = 's32[1]{0}', space=sflag, size = 0x4, scoped, tag = 'scoped memory for tpu_custom_call.1']
    #allocation5 [shape = 's32[1]{0}', space=sflag, size = 0x4, scoped, tag = 'scoped memory for tpu_custom_call.1']
    #allocation6 [shape = 'u8[8192]{0}', space=vmem, size = 0x2000, scoped, tag = 'input window, operand 1, single buffered']
    #allocation7 [shape = 's32[1]{0}', space=sflag, size = 0x4, scoped, tag = 'scoped memory for tpu_custom_call.1']
    #allocation8 [shape = 'u8[4096]{0}', space=vmem, size = 0x1000, scoped, tag = 'output window, operand 0, single buffered']
    %7 = vsyncpa [#allocation4], 0
    %8 = vsyncpa [#allocation7], 0
    %9 = vsyncpa [#allocation5], 0
    // Predicated region
    $region2: #{tpu_custom_call.1} parent=1 // pred_check
      _
    $region3: #{tpu_custom_call.1} parent=1 // pred_check_branch
      %11 = sbr.rel (0) target = $region5
    $region4: #{tpu_custom_call.1} parent=1 // pred_region
      %s13 = ssub.s32 256, 256
      %14 = vsyncadd [#allocation4], %s13
      %s15 = sshll.u32 [#allocation3], 4
      %s16 = int_to_ptr.vmem [resolvable:$true] %s15
      %21 = dma.hbm_to_vmem [thread:$0]  %s0, 256, %s16, [#allocation4], 64, 64, 4
    $region5: #{tpu_custom_call.1} parent=1 // pred_fallthru
      _
    // Predicated region
    $region6: #{tpu_custom_call.1} parent=1 // pred_check
      _
    $region7: #{tpu_custom_call.1} parent=1 // pred_check_branch
      %23 = sbr.rel (0) target = $region9
    $region8: #{tpu_custom_call.1} parent=1 // pred_region
      %s25 = ssub.s32 256, 256
      %26 = vsyncadd [#allocation7], %s25
      %s27 = sshll.u32 [#allocation6], 4
      %s28 = int_to_ptr.vmem [resolvable:$true] %s27
      %33 = dma.hbm_to_vmem [thread:$0]  %s1, 256, %s28, [#allocation7], 64, 64, 4
    $region9: #{tpu_custom_call.1} parent=1 // pred_fallthru
      _
    // Predicated region
    $region10: #{tpu_custom_call.1} parent=1 // pred_check
      _
    $region11: #{tpu_custom_call.1} parent=1 // pred_check_branch
      %35 = sbr.rel (0) target = $region13
    $region12: #{tpu_custom_call.1} parent=1 // pred_region
      %36 = dma.done [#allocation4], 256
    $region13: #{tpu_custom_call.1} parent=1 // pred_fallthru
      _
    // Predicated region
    $region14: #{tpu_custom_call.1} parent=1 // pred_check
      _
    $region15: #{tpu_custom_call.1} parent=1 // pred_check_branch
      %38 = sbr.rel (0) target = $region17
    $region16: #{tpu_custom_call.1} parent=1 // pred_region
      %39 = dma.done [#allocation7], 256
    $region17: #{tpu_custom_call.1} parent=1 // pred_fallthru
      _
    %v41 = vld [vmem:[#allocation3] sm:$0xf]
    %v42 = vunpack.c.l.bf16 %v41
    %vm43 = vcmask 64512
    %44 = vst.msk [vmem:[#allocation2] sm:$0xff] %vm43, %v42
    %s45 = scalar_lea.vmem [#allocation3], 4
    %v46 = vld [vmem:[%s45] sm:$0xf]
    %v47 = vunpack.c.l.bf16 %v46
    %49 = vrot.lane.b32.xlu0 %v47, 8
    %v50 = vpop.permute.xlu0 %49
    %vm52 = vcmask 130112
    %53 = vst.msk [vmem:[#allocation2] sm:$0xff] %vm52, %v50
    %s54 = scalar_lea.vmem [#allocation3], 8
    %v55 = vld [vmem:[%s54] sm:$0xf]
    %v56 = vunpack.c.l.bf16 %v55
    %58 = vrot.lane.b32.xlu0 %v56, 16
    %v59 = vpop.permute.xlu0 %58
    %vm61 = vcmask 195712
    %62 = vst.msk [vmem:[#allocation2] sm:$0xff] %vm61, %v59
    %s63 = scalar_lea.vmem [#allocation3], 12
    %v64 = vld [vmem:[%s63] sm:$0xf]
    %v65 = vunpack.c.l.bf16 %v64
    %67 = vrot.lane.b32.xlu0 %v65, 24
    %v68 = vpop.permute.xlu0 %67
    %vm70 = vcmask 261312
    %71 = vst.msk [vmem:[#allocation2] sm:$0xff] %vm70, %v68
    %v72 = vld [vmem:[#allocation2] sm:$0xff]
    %v73 = vpack.c.bf16 %v72, %v72
    %v74 = vld [vmem:[#allocation6] sm:$0xf]
    %v75 = vld [vmem:[#allocation6 + $0x4] sm:$0xf]
    %v76 = vld [vmem:[#allocation6 + $0x8] sm:$0xf]
    %v77 = vld [vmem:[#allocation6 + $0xc] sm:$0xf]
    %v82 = vunpack.c.l.b16 %v74
    %v83 = vunpack.c.l.b16 %v75
    %v84 = vunpack.c.l.b16 %v76
    %v85 = vunpack.c.l.b16 %v77
    %v86 = vpack.c.b16 %v83, %v82
    %v87 = vpack.c.b16 %v85, %v84
    %vm90 = vcmask 261120
    %v92 = vsel %vm90, %v73, 0
    %94 = vmatprep.subr.bf16.mxu0 0
    %95 = vmatpush1.bf16.msra.mxu0 0
    %96 = vmatprep.subr.bf16.mxu0 0
    %97 = vmatpush1.bf16.msra.mxu0 0
    %98 = vmatprep.subr.bf16.mxu0 0
    %99 = vmatpush1.bf16.msra.mxu0 0
    %100 = vmatprep.subr.bf16.mxu0 0
    %101 = vmatpush1.bf16.msra.mxu0 0
    %102 = vmatprep.subr.bf16.mxu0 0
    %103 = vmatpush1.bf16.msra.mxu0 0
    %104 = vmatprep.subr.bf16.mxu0 0
    %105 = vmatpush1.bf16.msra.mxu0 0
    %106 = vmatprep.subr.bf16.mxu0 0
    %107 = vmatpush1.bf16.msra.mxu0 %v87
    %108 = vmatprep.subr.bf16.mxu0 0
    %109 = vmatpush1.bf16.msra.mxu0 %v86
    %110 = vmatprep.subr.bf16.mxu0 0
    %111 = vmatpush2.bf16.msra.mxu0 0
    %112 = vmatprep.subr.bf16.mxu0 0
    %113 = vmatpush2.bf16.msra.mxu0 0
    %114 = vmatprep.subr.bf16.mxu0 0
    %115 = vmatpush2.bf16.msra.mxu0 0
    %116 = vmatprep.subr.bf16.mxu0 0
    %117 = vmatpush2.bf16.msra.mxu0 0
    %118 = vmatprep.subr.bf16.mxu0 0
    %119 = vmatpush2.bf16.msra.mxu0 0
    %120 = vmatprep.subr.bf16.mxu0 0
    %121 = vmatpush2.bf16.msra.mxu0 0
    %122 = vmatprep.subr.bf16.mxu0 0
    %123 = vmatpush2.bf16.msra.mxu0 0
    %124 = vmatprep.subr.bf16.mxu0 0
    %125 = vmatpush2.bf16.msra.mxu0 0
    %126 = vmatprep.mubr.bf16.mxu0 0
    %127 = vmatmul.mubr.bf16.gmra.mxu0 %v92
    %v128 = vpop.f32.mrf.mxu0
    %v129 = vadd.f32 0.0, %v128
    %v130 = vpop.f32.mrf.mxu0
    %v131 = vpop.f32.mrf.mxu0
    %v132 = vpop.f32.mrf.mxu0
    %133 = vdwg.mxu0
    %134 = vst.msk [vmem:[#allocation8] sm:$0xff] %vm90, %v129
    // Predicated region
    $region18: #{tpu_custom_call.1} parent=1 // pred_check
      _
    $region19: #{tpu_custom_call.1} parent=1 // pred_check_branch
      %136 = sbr.rel (0) target = $region21
    $region20: #{tpu_custom_call.1} parent=1 // pred_region
      %s138 = ssub.s32 128, 128
      %139 = vsyncadd [#allocation5], %s138
      %s141 = sshll.u32 [#allocation8], 4
      %s142 = int_to_ptr.vmem [resolvable:$true] %s141
      %144 = dma.vmem_to_hbm [thread:$0]  %s142, 128, %s2, [#allocation5]
    $region21: #{tpu_custom_call.1} parent=1 // pred_fallthru
      _
    // Predicated region
    $region22: #{tpu_custom_call.1} parent=1 // pred_check
      _
    $region23: #{tpu_custom_call.1} parent=1 // pred_check_branch
      %146 = sbr.rel (0) target = $region25
    $region24: #{tpu_custom_call.1} parent=1 // pred_region
      %147 = dma.done [#allocation5], 128
    $region25: #{tpu_custom_call.1} parent=1 // pred_fallthru
      _
    %148 = vsyncpa [#allocation4], 1
    %149 = vsyncpa [#allocation7], 1
    %150 = vsyncpa [#allocation5], 1

// kernel: tpu_custom_call.1
$region0: #{tpu_custom_call.1}
  #allocation0 [shape = 'u32[]', space=smem, size = 0x4, offset = 0x4, fixed_abs, tag = 'smem constant byte address 0x4 - core index']
  #allocation1 [shape = 'u32[144,128]{1,0:T(1,128)}', space=vmem, size = 0x12000, scoped, tag = 'internal scratch']
  %s0 = inlined_call_operand.vmem [shape: f32[16,32], index: 0, kind: input, shape index: {}]
  %s1 = inlined_call_operand.vmem [shape: f32[16,1], index: 1, kind: input, shape index: {}]
  %s2 = inlined_call_operand.vmem [shape: f32[1,32], index: 2, kind: input, shape index: {}]
  %s3 = inlined_call_operand.vmem [shape: f32[1,32], index: 3, kind: input, shape index: {}]
  %s4 = inlined_call_operand.hbm [shape: f32[16,32], index: 4, kind: output, shape index: {}]
  %s5 = sld [smem:[#allocation0]]
  $region26: #{tpu_custom_call.1} parent=0
    _
  %s7 = ssub.s32 1, %s5
  %s8 = scalar_select 0, %s7, %s5
  $region1: #{tpu_custom_call.1} parent=0
    #allocation2 [shape = 'u8[8192]{0}', space=vmem, size = 0x2000, scoped, tag = 'output window, operand 0, single buffered']
    #allocation3 [shape = 's32[1]{0}', space=sflag, size = 0x4, scoped, tag = 'scoped memory for tpu_custom_call.1']
    %9 = vsyncpa [#allocation3], 0
    // Predicated region
    $region2: #{tpu_custom_call.1} parent=1 // pred_check
      _
    $region3: #{tpu_custom_call.1} parent=1 // pred_check_branch
      %11 = sbr.rel (0) target = $region5
    $region4: #{tpu_custom_call.1} parent=1 // pred_region
      _
    $region5: #{tpu_custom_call.1} parent=1 // pred_fallthru
      _
    // Predicated region
    $region6: #{tpu_custom_call.1} parent=1 // pred_check
      _
    $region7: #{tpu_custom_call.1} parent=1 // pred_check_branch
      %13 = sbr.rel (0) target = $region9
    $region8: #{tpu_custom_call.1} parent=1 // pred_region
      _
    $region9: #{tpu_custom_call.1} parent=1 // pred_fallthru
      _
    // Predicated region
    $region10: #{tpu_custom_call.1} parent=1 // pred_check
      _
    $region11: #{tpu_custom_call.1} parent=1 // pred_check_branch
      %15 = sbr.rel (0) target = $region13
    $region12: #{tpu_custom_call.1} parent=1 // pred_region
      _
    $region13: #{tpu_custom_call.1} parent=1 // pred_fallthru
      _
    // Predicated region
    $region14: #{tpu_custom_call.1} parent=1 // pred_check
      _
    $region15: #{tpu_custom_call.1} parent=1 // pred_check_branch
      %17 = sbr.rel (0) target = $region17
    $region16: #{tpu_custom_call.1} parent=1 // pred_region
      _
    $region17: #{tpu_custom_call.1} parent=1 // pred_fallthru
      _
    %v18 = vld [vmem:[%s0] sm:$0xff]
    %v19 = vld [vmem:[%s0 + $0x8] sm:$0xff]
    %v20 = vld [vmem:[%s2] sm:$0x1]
    %v21 = vld [vmem:[%s3] sm:$0x1]
    %vm22 = vcmask 261120
    %v23 = vsel %vm22, %v18, 0.0
    %24 = vadd.xlane.f32.xlu0 %v23
    %v25 = vpop.xlane.xlu0 %24
    %v26 = vsel %vm22, %v19, 0.0
    %27 = vadd.xlane.f32.xlu0 %v26
    %v28 = vpop.xlane.xlu0 %27
    %v29 = vrcp.pop 32.0
    %v30 = vmul.f32 %v25, %v29
    %v31 = vmul.f32 %v28, %v29
    %v32 = vsub.f32 %v18, %v30
    %v33 = vsub.f32 %v19, %v31
    %v34 = vmul.f32 %v32, %v32
    %v35 = vmul.f32 %v33, %v33
    %v36 = vsel %vm22, %v34, 0.0
    %37 = vadd.xlane.f32.xlu0 %v36
    %v38 = vpop.xlane.xlu0 %37
    %v39 = vsel %vm22, %v35, 0.0
    %40 = vadd.xlane.f32.xlu0 %v39
    %v41 = vpop.xlane.xlu0 %40
    %v42 = vmul.f32 %v38, %v29
    %v43 = vmul.f32 %v41, %v29
    %v44 = vadd.f32 %v42, 1e-05
    %v45 = vadd.f32 %v43, 1e-05
    %v46 = vrsqrt.pop %v44
    %v47 = vrsqrt.pop %v45
    %v48 = vmul.f32 %v32, %v46
    %v49 = vmul.f32 %v33, %v47
    %v51 = vlaneseq
    %v52 = vshrl.u32 %v51, 7
    %v53 = vsub.s32 0, %v52
    %v54 = vrot.slane %v20, %v53
    %v56 = vmul.f32 %v48, %v54
    %v57 = vmul.f32 %v49, %v54
    %v59 = vlaneseq
    %v60 = vshrl.u32 %v59, 7
    %v61 = vsub.s32 0, %v60
    %v62 = vrot.slane %v21, %v61
    %v64 = vadd.f32 %v56, %v62
    %v65 = vadd.f32 %v57, %v62
    %v66 = vld [vmem:[%s1] sm:$0xff]
    %v67 = vld [vmem:[%s1 + $0x8] sm:$0xff]
    %69 = vset.pattern.permute.xlu0 0
    %70 = vperm.xlu0 %69, %v66
    %v71 = vpop.permute.xlu0 %70
    %74 = vset.pattern.permute.xlu0 0
    %75 = vperm.xlu0 %74, %v67
    %v76 = vpop.permute.xlu0 %75
    %v78 = vmul.f32 %v64, %v71
    %v79 = vmul.f32 %v65, %v76
    %80 = vst.msk [vmem:[#allocation2] sm:$0xff] %vm22, %v78
    %81 = vst.msk [vmem:[#allocation2 + $0x8] sm:$0xff] %vm22, %v79
    // Predicated region
    $region18: #{tpu_custom_call.1} parent=1 // pred_check
      _
    $region19: #{tpu_custom_call.1} parent=1 // pred_check_branch
      %83 = sbr.rel (0) target = $region21
    $region20: #{tpu_custom_call.1} parent=1 // pred_region
      %s85 = ssub.s32 256, 256
      %86 = vsyncadd [#allocation3], %s85
      %s87 = sshll.u32 [#allocation2], 4
      %s88 = int_to_ptr.vmem [resolvable:$true] %s87
      %93 = dma.vmem_to_hbm [thread:$0]  %s88, 256, %s4, [#allocation3], 128, 128, 8
    $region21: #{tpu_custom_call.1} parent=1 // pred_fallthru
      _
    // Predicated region
    $region22: #{tpu_custom_call.1} parent=1 // pred_check
      _
    $region23: #{tpu_custom_call.1} parent=1 // pred_check_branch
      %95 = sbr.rel (0) target = $region25
    $region24: #{tpu_custom_call.1} parent=1 // pred_region
      %96 = dma.done [#allocation3], 256
    $region25: #{tpu_custom_call.1} parent=1 // pred_fallthru
      _
    %97 = vsyncpa [#allocation3], 1

</llo_original>
